<compile_context>
chip_gen: v6e
topology: v6e:2x2x1
jax: 0.10.0
libtpu: 0.0.40
codegen_flags: <defaults>
</compile_context>

<pallas_src>
import functools

import jax
import jax.numpy as jnp
from jax.experimental import pallas as pl
from jax.experimental.pallas import tpu as pltpu


def _round_up(x: int, m: int) -> int:
    return ((x + m - 1) // m) * m


def _vmem_capacity_bytes() -> int:
    try:
        return int(pltpu.get_tpu_info().vmem_capacity_bytes)
    except Exception:
        return 64 * 1024 * 1024  # conservative (v7x per-TC size)


# ----------------------------- Pallas kernel -------------------------------
def _fcblock_kernel(*refs, n_layers: int, outermost_linear: bool):
    """Fused MLP: o = L_{n-1}(... L_0(x)), L_i = [relu](x @ W_i + b_i).

    refs layout: (x_ref, w_0, b_0, w_1, b_1, ..., w_{n-1}, b_{n-1}, o_ref)
      x_ref : (tile_m, in_feat)   bf16 input tile (exact feature width)
      w_l   : (K_l, N_l)          bf16 weight, (K, N) layout, hidden dims
                                  zero-padded to multiples of 128
      b_l   : (1, N_l)            fp32 bias
      o_ref : (tile_m, out_feat)  fp32 output tile (exact feature width)
    """
    x_ref, o_ref = refs[0], refs[-1]
    wb_refs = refs[1:-1]

    h = x_ref[...]                                # bf16 activations
    # Static unroll: per-layer shapes differ (first/last are rectangular) and
    # FCBlock stacks are shallow, so all weights stay VMEM-resident.
    # TODO(synk): for very deep uniform stacks (>~16 hidden layers) switch the
    # middle layers to a stacked weight array + lax.fori_loop to bound vregs.
    for layer in range(n_layers):
        w = wb_refs[2 * layer][...]               # (K_l, N_l) bf16
        b = wb_refs[2 * layer + 1][...]           # (1, N_l)  fp32
        # MXU bf16 matmul with fp32 accumulation; bias add in fp32.
        y = jnp.dot(h, w, preferred_element_type=jnp.float32) + b
        if not (layer == n_layers - 1 and outermost_linear):
            y = jnp.maximum(y, 0.0)               # lean fp32 epilogue
        if layer == n_layers - 1:
            o_ref[...] = y.astype(o_ref.dtype)
        else:
            h = y.astype(jnp.bfloat16)            # back to bf16 for next dot


# ------------------------- one-time parameter prep --------------------------
def prepare_fcblock_params(params):
    """One-time conversion of PyTorch-layout params [(W(out,in), b(out,)), ...]
    into kernel-ready arrays: weights transposed to (K, N) layout and cast to
    bf16, hidden widths zero-padded to multiples of 128, biases kept fp32.

    The first layer's K and the last layer's N stay exact so the kernel input
    and output need no feature padding."""
    n_layers = len(params)
    prepared = []
    for idx, (w, b) in enumerate(params):
        out_f, in_f = w.shape
        k_pad = in_f if idx == 0 else _round_up(in_f, 128)
        n_pad = out_f if idx == n_layers - 1 else _round_up(out_f, 128)
        w_t = jnp.asarray(w, jnp.float32).T.astype(jnp.bfloat16)     # (K, N)
        w_p = jnp.pad(w_t, ((0, k_pad - in_f), (0, n_pad - out_f)))
        b_p = jnp.pad(jnp.asarray(b, jnp.float32),
                      (0, n_pad - out_f)).reshape(1, n_pad)
        prepared.append((w_p, b_p))
    return prepared


# ----------------------------- forward wrapper -------------------------------
def fcblock_forward(prepared_params, x, *, outermost_linear=False, tile_m=None):
    """Forward pass of FCBlock. x: (..., in_features); prepared_params from
    prepare_fcblock_params. Output is fp32 (..., out_features)."""
    lead_shape = x.shape[:-1]
    in_feat = x.shape[-1]
    n_layers = len(prepared_params)
    out_features = prepared_params[-1][0].shape[1]
    assert prepared_params[0][0].shape[0] == in_feat

    x2d = x.reshape(-1, in_feat).astype(jnp.bfloat16)   # bf16 feed to the MXU
    M = x2d.shape[0]

    vmem_cap = _vmem_capacity_bytes()
    if tile_m is None:
        # Bigger M tiles on 128 MiB parts (v5e/v6e); smaller on v7x (64 MiB/TC).
        tile_m = 1024 if vmem_cap >= 96 * 1024 * 1024 else 512
    tile_m = _round_up(min(int(tile_m), _round_up(M, 8)), 8)
    # v7x has two TensorCores; give the "parallel" M axis >= 2 tiles when there
    # is enough work to split.
    if pl.cdiv(M, tile_m) == 1 and M >= 512:
        tile_m = _round_up(pl.cdiv(M, 2), 8)
    grid_m = pl.cdiv(M, tile_m)                          # ragged last tile OK

    flat = []
    for w_p, b_p in prepared_params:
        flat += [w_p, b_p]

    kernel = functools.partial(_fcblock_kernel, n_layers=n_layers,
                               outermost_linear=outermost_linear)
    vmem_limit = int(min(vmem_cap * 0.8, 100 * 1024 * 1024))

    def build(weight_pipeline_mode):
        wkw = ({} if weight_pipeline_mode is None
               else {"pipeline_mode": weight_pipeline_mode})
        in_specs = [pl.BlockSpec((tile_m, in_feat), lambda i: (i, 0))]
        for w_p, b_p in prepared_params:
            in_specs.append(pl.BlockSpec(w_p.shape, lambda i: (0, 0), **wkw))
            in_specs.append(pl.BlockSpec(b_p.shape, lambda i: (0, 0), **wkw))
        return pl.pallas_call(
            kernel,
            out_shape=jax.ShapeDtypeStruct((M, out_features), jnp.float32),
            grid=(grid_m,),
            in_specs=in_specs,
            out_specs=pl.BlockSpec((tile_m, out_features), lambda i: (i, 0)),
            compiler_params=pltpu.CompilerParams(
                dimension_semantics=("parallel",),
                vmem_limit_bytes=vmem_limit,
            ),
        )

    try:
        # Weights/biases are grid-invariant: single-buffer them so they are not
        # double-buffered in VMEM.
        out = build(pl.Buffered(buffer_count=1))(x2d, *flat)
    except Exception:
        # pipeline_mode / Buffered(1) unsupported in this JAX: default buffering.
        out = build(None)(x2d, *flat)

    return out.reshape(*lead_shape, out_features)


# ----------------------------- params & references --------------------------
def init_fcblock_params(key, hidden_ch, num_hidden_layers, in_features,
                        out_features):
    """Kaiming-normal (fan_in, relu) weights, zero biases — matches init_weights."""
    dims = [(in_features, hidden_ch)]
    dims += [(hidden_ch, hidden_ch)] * num_hidden_layers
    dims += [(hidden_ch, out_features)]

    params = []
    for (fan_in, fan_out) in dims:
        key, wk = jax.random.split(key)
        std = (2.0 / fan_in) ** 0.5
        w = std * jax.random.normal(wk, (fan_out, fan_in), dtype=jnp.float32)
        b = jnp.zeros((fan_out,), dtype=jnp.float32)
        params.append((w, b))
    return params


def fcblock_ref(params, x, *, outermost_linear=False):
    """Pure fp32 reference (PyTorch semantics)."""
    lead_shape = x.shape[:-1]
    h = x.reshape(-1, x.shape[-1]).astype(jnp.float32)
    n_layers = len(params)
    for idx, (w, b) in enumerate(params):
        h = h @ w.T + b
        if not (idx == n_layers - 1 and outermost_linear):
            h = jnp.maximum(h, 0.0)
    return h.reshape(*lead_shape, h.shape[-1])


def fcblock_ref_bf16(params, x, *, outermost_linear=False):
    """Reference that mimics the kernel's bf16-storage / fp32-accumulate math."""
    lead_shape = x.shape[:-1]
    h = x.reshape(-1, x.shape[-1]).astype(jnp.bfloat16)
    n_layers = len(params)
    for idx, (w, b) in enumerate(params):
        w_bf = jnp.asarray(w, jnp.float32).T.astype(jnp.bfloat16)
        y = jnp.dot(h, w_bf, preferred_element_type=jnp.float32)
        y = y + jnp.asarray(b, jnp.float32)
        if not (idx == n_layers - 1 and outermost_linear):
            y = jnp.maximum(y, 0.0)
        h = y.astype(jnp.bfloat16) if idx < n_layers - 1 else y
    return h.reshape(*lead_shape, h.shape[-1])


# ----------------------------------- demo -----------------------------------
if __name__ == "__main__":
    # Small shapes consistent with an FCBlock MLP.
    batch, seq = 2, 8
    in_features, hidden_ch, out_features = 32, 32, 16
    num_hidden_layers = 2

    key = jax.random.PRNGKey(0)
    pkey, xkey = jax.random.split(key)

    params = init_fcblock_params(pkey, hidden_ch, num_hidden_layers,
                                 in_features, out_features)
    x = jax.random.normal(xkey, (batch, seq, in_features), dtype=jnp.float32)

    prepared = prepare_fcblock_params(params)    # one-time host-side prep

    ok = True
    for outermost_linear in (False, True):
        out = fcblock_forward(prepared, x, outermost_linear=outermost_linear)
        out = jax.block_until_ready(out)
        ok &= out.shape == (batch, seq, out_features)
        ok &= bool(jnp.all(jnp.isfinite(out)))
        # Tight check vs. bf16-weight / fp32-accumulate reference.
        ref_bf = fcblock_ref_bf16(params, x, outermost_linear=outermost_linear)
        ok &= bool(jnp.allclose(out, ref_bf, atol=5e-3, rtol=5e-3))
        # Loose check vs. the pure-fp32 reference (bf16 rounding tolerance).
        ref_f32 = fcblock_ref(params, x, outermost_linear=outermost_linear)
        ok &= bool(jnp.allclose(out, ref_f32, atol=5e-2, rtol=5e-2))

    assert ok
    print("KERNEL_OK")
</pallas_src>

<mosaic_0001>
module attributes {stable_mosaic.version = 11 : i64} {
  func.func @_fcblock_kernel(%arg0: i32, %arg1: memref<16x32xbf16, #tpu.memory_space<vmem>>, %arg2: memref<32x128xbf16, #tpu.memory_space<vmem>>, %arg3: memref<1x128xf32, #tpu.memory_space<vmem>>, %arg4: memref<128x128xbf16, #tpu.memory_space<vmem>>, %arg5: memref<1x128xf32, #tpu.memory_space<vmem>>, %arg6: memref<128x128xbf16, #tpu.memory_space<vmem>>, %arg7: memref<1x128xf32, #tpu.memory_space<vmem>>, %arg8: memref<128x16xbf16, #tpu.memory_space<vmem>>, %arg9: memref<1x16xf32, #tpu.memory_space<vmem>>, %arg10: memref<16x16xf32, #tpu.memory_space<vmem>>) attributes {dimension_semantics = [#tpu.dimension_semantics<parallel>], iteration_bounds = array<i64: 1>, scalar_prefetch = 0 : i64, scratch_operands = 0 : i64, tpu.core_type = #tpu.core_type<tc>, window_params = [{transform_indices = @transform_0, window_bounds = array<i64: 16, 32>}, {pipeline_mode = #tpu.pipeline_mode<synchronous>, transform_indices = @transform_1, window_bounds = array<i64: 32, 128>}, {pipeline_mode = #tpu.pipeline_mode<synchronous>, transform_indices = @transform_2, window_bounds = array<i64: 1, 128>}, {pipeline_mode = #tpu.pipeline_mode<synchronous>, transform_indices = @transform_3, window_bounds = array<i64: 128, 128>}, {pipeline_mode = #tpu.pipeline_mode<synchronous>, transform_indices = @transform_4, window_bounds = array<i64: 1, 128>}, {pipeline_mode = #tpu.pipeline_mode<synchronous>, transform_indices = @transform_5, window_bounds = array<i64: 128, 128>}, {pipeline_mode = #tpu.pipeline_mode<synchronous>, transform_indices = @transform_6, window_bounds = array<i64: 1, 128>}, {pipeline_mode = #tpu.pipeline_mode<synchronous>, transform_indices = @transform_7, window_bounds = array<i64: 128, 16>}, {pipeline_mode = #tpu.pipeline_mode<synchronous>, transform_indices = @transform_8, window_bounds = array<i64: 1, 16>}, {transform_indices = @transform_9, window_bounds = array<i64: 16, 16>}]} {
    %c0 = arith.constant 0 : index
    %c0_0 = arith.constant 0 : index
    %0 = vector.load %arg1[%c0, %c0_0] : memref<16x32xbf16, #tpu.memory_space<vmem>>, vector<16x32xbf16>
    %c0_1 = arith.constant 0 : index
    %c0_2 = arith.constant 0 : index
    %1 = vector.load %arg2[%c0_1, %c0_2] : memref<32x128xbf16, #tpu.memory_space<vmem>>, vector<32x128xbf16>
    %c0_3 = arith.constant 0 : index
    %c0_4 = arith.constant 0 : index
    %2 = vector.load %arg3[%c0_3, %c0_4] : memref<1x128xf32, #tpu.memory_space<vmem>>, vector<1x128xf32>
    %cst = arith.constant dense<0.000000e+00> : vector<16x128xf32>
    %3 = tpu.matmul %0, %1, %cst {dimension_numbers = #tpu.dot_dimension_numbers<[1], [0], [0], [1], [0, 0, 1, 1], [], []>} : vector<16x32xbf16>, vector<32x128xbf16>, vector<16x128xf32> -> vector<16x128xf32>
    %4 = vector.broadcast %2 : vector<1x128xf32> to vector<16x128xf32>
    %5 = arith.addf %3, %4 : vector<16x128xf32>
    %cst_5 = arith.constant 0.000000e+00 : f32
    %6 = vector.broadcast %cst_5 : f32 to vector<16x128xf32>
    %7 = arith.maximumf %5, %6 : vector<16x128xf32>
    %8 = arith.truncf %7 : vector<16x128xf32> to vector<16x128xbf16>
    %c0_6 = arith.constant 0 : index
    %c0_7 = arith.constant 0 : index
    %9 = vector.load %arg4[%c0_6, %c0_7] : memref<128x128xbf16, #tpu.memory_space<vmem>>, vector<128x128xbf16>
    %c0_8 = arith.constant 0 : index
    %c0_9 = arith.constant 0 : index
    %10 = vector.load %arg5[%c0_8, %c0_9] : memref<1x128xf32, #tpu.memory_space<vmem>>, vector<1x128xf32>
    %cst_10 = arith.constant dense<0.000000e+00> : vector<16x128xf32>
    %11 = tpu.matmul %8, %9, %cst_10 {dimension_numbers = #tpu.dot_dimension_numbers<[1], [0], [0], [1], [0, 0, 1, 1], [], []>} : vector<16x128xbf16>, vector<128x128xbf16>, vector<16x128xf32> -> vector<16x128xf32>
    %12 = vector.broadcast %10 : vector<1x128xf32> to vector<16x128xf32>
    %13 = arith.addf %11, %12 : vector<16x128xf32>
    %cst_11 = arith.constant 0.000000e+00 : f32
    %14 = vector.broadcast %cst_11 : f32 to vector<16x128xf32>
    %15 = arith.maximumf %13, %14 : vector<16x128xf32>
    %16 = arith.truncf %15 : vector<16x128xf32> to vector<16x128xbf16>
    %c0_12 = arith.constant 0 : index
    %c0_13 = arith.constant 0 : index
    %17 = vector.load %arg6[%c0_12, %c0_13] : memref<128x128xbf16, #tpu.memory_space<vmem>>, vector<128x128xbf16>
    %c0_14 = arith.constant 0 : index
    %c0_15 = arith.constant 0 : index
    %18 = vector.load %arg7[%c0_14, %c0_15] : memref<1x128xf32, #tpu.memory_space<vmem>>, vector<1x128xf32>
    %cst_16 = arith.constant dense<0.000000e+00> : vector<16x128xf32>
    %19 = tpu.matmul %16, %17, %cst_16 {dimension_numbers = #tpu.dot_dimension_numbers<[1], [0], [0], [1], [0, 0, 1, 1], [], []>} : vector<16x128xbf16>, vector<128x128xbf16>, vector<16x128xf32> -> vector<16x128xf32>
    %20 = vector.broadcast %18 : vector<1x128xf32> to vector<16x128xf32>
    %21 = arith.addf %19, %20 : vector<16x128xf32>
    %cst_17 = arith.constant 0.000000e+00 : f32
    %22 = vector.broadcast %cst_17 : f32 to vector<16x128xf32>
    %23 = arith.maximumf %21, %22 : vector<16x128xf32>
    %24 = arith.truncf %23 : vector<16x128xf32> to vector<16x128xbf16>
    %c0_18 = arith.constant 0 : index
    %c0_19 = arith.constant 0 : index
    %25 = vector.load %arg8[%c0_18, %c0_19] : memref<128x16xbf16, #tpu.memory_space<vmem>>, vector<128x16xbf16>
    %c0_20 = arith.constant 0 : index
    %c0_21 = arith.constant 0 : index
    %26 = vector.load %arg9[%c0_20, %c0_21] : memref<1x16xf32, #tpu.memory_space<vmem>>, vector<1x16xf32>
    %cst_22 = arith.constant dense<0.000000e+00> : vector<16x16xf32>
    %27 = tpu.matmul %24, %25, %cst_22 {dimension_numbers = #tpu.dot_dimension_numbers<[1], [0], [0], [1], [0, 0, 1, 1], [], []>} : vector<16x128xbf16>, vector<128x16xbf16>, vector<16x16xf32> -> vector<16x16xf32>
    %28 = vector.broadcast %26 : vector<1x16xf32> to vector<16x16xf32>
    %29 = arith.addf %27, %28 : vector<16x16xf32>
    %cst_23 = arith.constant 0.000000e+00 : f32
    %30 = vector.broadcast %cst_23 : f32 to vector<16x16xf32>
    %31 = arith.maximumf %29, %30 : vector<16x16xf32>
    %c0_24 = arith.constant 0 : index
    %c0_25 = arith.constant 0 : index
    %32 = vector.load %arg10[%c0_24, %c0_25] : memref<16x16xf32, #tpu.memory_space<vmem>>, vector<16x16xf32>
    tpu.vector_store %arg10[%c0_24, %c0_25], %31 {strides = array<i32>} : memref<16x16xf32, #tpu.memory_space<vmem>>, vector<16x16xf32>,
    return
  }
  func.func @transform_0(%arg0: i32) -> (i32, i32) {
    %c0_i32 = arith.constant 0 : i32
    %c0_i32_0 = arith.constant 0 : i32
    return %arg0, %c0_i32 : i32, i32
  }
  func.func @transform_1(%arg0: i32) -> (i32, i32) {
    %c0_i32 = arith.constant 0 : i32
    %c0_i32_0 = arith.constant 0 : i32
    %c0_i32_1 = arith.constant 0 : i32
    return %c0_i32, %c0_i32_0 : i32, i32
  }
  func.func @transform_2(%arg0: i32) -> (i32, i32) {
    %c0_i32 = arith.constant 0 : i32
    %c0_i32_0 = arith.constant 0 : i32
    %c0_i32_1 = arith.constant 0 : i32
    return %c0_i32, %c0_i32_0 : i32, i32
  }
  func.func @transform_3(%arg0: i32) -> (i32, i32) {
    %c0_i32 = arith.constant 0 : i32
    %c0_i32_0 = arith.constant 0 : i32
    %c0_i32_1 = arith.constant 0 : i32
    return %c0_i32, %c0_i32_0 : i32, i32
  }
  func.func @transform_4(%arg0: i32) -> (i32, i32) {
    %c0_i32 = arith.constant 0 : i32
    %c0_i32_0 = arith.constant 0 : i32
    %c0_i32_1 = arith.constant 0 : i32
    return %c0_i32, %c0_i32_0 : i32, i32
  }
  func.func @transform_5(%arg0: i32) -> (i32, i32) {
    %c0_i32 = arith.constant 0 : i32
    %c0_i32_0 = arith.constant 0 : i32
    %c0_i32_1 = arith.constant 0 : i32
    return %c0_i32, %c0_i32_0 : i32, i32
  }
  func.func @transform_6(%arg0: i32) -> (i32, i32) {
    %c0_i32 = arith.constant 0 : i32
    %c0_i32_0 = arith.constant 0 : i32
    %c0_i32_1 = arith.constant 0 : i32
    return %c0_i32, %c0_i32_0 : i32, i32
  }
  func.func @transform_7(%arg0: i32) -> (i32, i32) {
    %c0_i32 = arith.constant 0 : i32
    %c0_i32_0 = arith.constant 0 : i32
    %c0_i32_1 = arith.constant 0 : i32
    return %c0_i32, %c0_i32_0 : i32, i32
  }
  func.func @transform_8(%arg0: i32) -> (i32, i32) {
    %c0_i32 = arith.constant 0 : i32
    %c0_i32_0 = arith.constant 0 : i32
    %c0_i32_1 = arith.constant 0 : i32
    return %c0_i32, %c0_i32_0 : i32, i32
  }
  func.func @transform_9(%arg0: i32) -> (i32, i32) {
    %c0_i32 = arith.constant 0 : i32
    %c0_i32_0 = arith.constant 0 : i32
    return %arg0, %c0_i32 : i32, i32
  }
}

module attributes {stable_mosaic.version = 11 : i64} {
  func.func @_fcblock_kernel(%arg0: i32, %arg1: memref<16x32xbf16, #tpu.memory_space<vmem>>, %arg2: memref<32x128xbf16, #tpu.memory_space<vmem>>, %arg3: memref<1x128xf32, #tpu.memory_space<vmem>>, %arg4: memref<128x128xbf16, #tpu.memory_space<vmem>>, %arg5: memref<1x128xf32, #tpu.memory_space<vmem>>, %arg6: memref<128x128xbf16, #tpu.memory_space<vmem>>, %arg7: memref<1x128xf32, #tpu.memory_space<vmem>>, %arg8: memref<128x16xbf16, #tpu.memory_space<vmem>>, %arg9: memref<1x16xf32, #tpu.memory_space<vmem>>, %arg10: memref<16x16xf32, #tpu.memory_space<vmem>>) attributes {dimension_semantics = [#tpu.dimension_semantics<parallel>], iteration_bounds = array<i64: 1>, scalar_prefetch = 0 : i64, scratch_operands = 0 : i64, tpu.core_type = #tpu.core_type<tc>, window_params = [{transform_indices = @transform_0, window_bounds = array<i64: 16, 32>}, {pipeline_mode = #tpu.pipeline_mode<synchronous>, transform_indices = @transform_1, window_bounds = array<i64: 32, 128>}, {pipeline_mode = #tpu.pipeline_mode<synchronous>, transform_indices = @transform_2, window_bounds = array<i64: 1, 128>}, {pipeline_mode = #tpu.pipeline_mode<synchronous>, transform_indices = @transform_3, window_bounds = array<i64: 128, 128>}, {pipeline_mode = #tpu.pipeline_mode<synchronous>, transform_indices = @transform_4, window_bounds = array<i64: 1, 128>}, {pipeline_mode = #tpu.pipeline_mode<synchronous>, transform_indices = @transform_5, window_bounds = array<i64: 128, 128>}, {pipeline_mode = #tpu.pipeline_mode<synchronous>, transform_indices = @transform_6, window_bounds = array<i64: 1, 128>}, {pipeline_mode = #tpu.pipeline_mode<synchronous>, transform_indices = @transform_7, window_bounds = array<i64: 128, 16>}, {pipeline_mode = #tpu.pipeline_mode<synchronous>, transform_indices = @transform_8, window_bounds = array<i64: 1, 16>}, {transform_indices = @transform_9, window_bounds = array<i64: 16, 16>}]} {
    %c0 = arith.constant 0 : index
    %c0_0 = arith.constant 0 : index
    %0 = vector.load %arg1[%c0, %c0_0] : memref<16x32xbf16, #tpu.memory_space<vmem>>, vector<16x32xbf16>
    %c0_1 = arith.constant 0 : index
    %c0_2 = arith.constant 0 : index
    %1 = vector.load %arg2[%c0_1, %c0_2] : memref<32x128xbf16, #tpu.memory_space<vmem>>, vector<32x128xbf16>
    %c0_3 = arith.constant 0 : index
    %c0_4 = arith.constant 0 : index
    %2 = vector.load %arg3[%c0_3, %c0_4] : memref<1x128xf32, #tpu.memory_space<vmem>>, vector<1x128xf32>
    %cst = arith.constant dense<0.000000e+00> : vector<16x128xf32>
    %3 = tpu.matmul %0, %1, %cst {dimension_numbers = #tpu.dot_dimension_numbers<[1], [0], [0], [1], [0, 0, 1, 1], [], []>} : vector<16x32xbf16>, vector<32x128xbf16>, vector<16x128xf32> -> vector<16x128xf32>
    %4 = vector.broadcast %2 : vector<1x128xf32> to vector<16x128xf32>
    %5 = arith.addf %3, %4 : vector<16x128xf32>
    %cst_5 = arith.constant 0.000000e+00 : f32
    %6 = vector.broadcast %cst_5 : f32 to vector<16x128xf32>
    %7 = arith.maximumf %5, %6 : vector<16x128xf32>
    %8 = arith.truncf %7 : vector<16x128xf32> to vector<16x128xbf16>
    %c0_6 = arith.constant 0 : index
    %c0_7 = arith.constant 0 : index
    %9 = vector.load %arg4[%c0_6, %c0_7] : memref<128x128xbf16, #tpu.memory_space<vmem>>, vector<128x128xbf16>
    %c0_8 = arith.constant 0 : index
    %c0_9 = arith.constant 0 : index
    %10 = vector.load %arg5[%c0_8, %c0_9] : memref<1x128xf32, #tpu.memory_space<vmem>>, vector<1x128xf32>
    %cst_10 = arith.constant dense<0.000000e+00> : vector<16x128xf32>
    %11 = tpu.matmul %8, %9, %cst_10 {dimension_numbers = #tpu.dot_dimension_numbers<[1], [0], [0], [1], [0, 0, 1, 1], [], []>} : vector<16x128xbf16>, vector<128x128xbf16>, vector<16x128xf32> -> vector<16x128xf32>
    %12 = vector.broadcast %10 : vector<1x128xf32> to vector<16x128xf32>
    %13 = arith.addf %11, %12 : vector<16x128xf32>
    %cst_11 = arith.constant 0.000000e+00 : f32
    %14 = vector.broadcast %cst_11 : f32 to vector<16x128xf32>
    %15 = arith.maximumf %13, %14 : vector<16x128xf32>
    %16 = arith.truncf %15 : vector<16x128xf32> to vector<16x128xbf16>
    %c0_12 = arith.constant 0 : index
    %c0_13 = arith.constant 0 : index
    %17 = vector.load %arg6[%c0_12, %c0_13] : memref<128x128xbf16, #tpu.memory_space<vmem>>, vector<128x128xbf16>
    %c0_14 = arith.constant 0 : index
    %c0_15 = arith.constant 0 : index
    %18 = vector.load %arg7[%c0_14, %c0_15] : memref<1x128xf32, #tpu.memory_space<vmem>>, vector<1x128xf32>
    %cst_16 = arith.constant dense<0.000000e+00> : vector<16x128xf32>
    %19 = tpu.matmul %16, %17, %cst_16 {dimension_numbers = #tpu.dot_dimension_numbers<[1], [0], [0], [1], [0, 0, 1, 1], [], []>} : vector<16x128xbf16>, vector<128x128xbf16>, vector<16x128xf32> -> vector<16x128xf32>
    %20 = vector.broadcast %18 : vector<1x128xf32> to vector<16x128xf32>
    %21 = arith.addf %19, %20 : vector<16x128xf32>
    %cst_17 = arith.constant 0.000000e+00 : f32
    %22 = vector.broadcast %cst_17 : f32 to vector<16x128xf32>
    %23 = arith.maximumf %21, %22 : vector<16x128xf32>
    %24 = arith.truncf %23 : vector<16x128xf32> to vector<16x128xbf16>
    %c0_18 = arith.constant 0 : index
    %c0_19 = arith.constant 0 : index
    %25 = vector.load %arg8[%c0_18, %c0_19] : memref<128x16xbf16, #tpu.memory_space<vmem>>, vector<128x16xbf16>
    %c0_20 = arith.constant 0 : index
    %c0_21 = arith.constant 0 : index
    %26 = vector.load %arg9[%c0_20, %c0_21] : memref<1x16xf32, #tpu.memory_space<vmem>>, vector<1x16xf32>
    %cst_22 = arith.constant dense<0.000000e+00> : vector<16x16xf32>
    %27 = tpu.matmul %24, %25, %cst_22 {dimension_numbers = #tpu.dot_dimension_numbers<[1], [0], [0], [1], [0, 0, 1, 1], [], []>} : vector<16x128xbf16>, vector<128x16xbf16>, vector<16x16xf32> -> vector<16x16xf32>
    %28 = vector.broadcast %26 : vector<1x16xf32> to vector<16x16xf32>
    %29 = arith.addf %27, %28 : vector<16x16xf32>
    %cst_23 = arith.constant 0.000000e+00 : f32
    %30 = vector.broadcast %cst_23 : f32 to vector<16x16xf32>
    %31 = arith.maximumf %29, %30 : vector<16x16xf32>
    %c0_24 = arith.constant 0 : index
    %c0_25 = arith.constant 0 : index
    %32 = vector.load %arg10[%c0_24, %c0_25] : memref<16x16xf32, #tpu.memory_space<vmem>>, vector<16x16xf32>
    tpu.vector_store %arg10[%c0_24, %c0_25], %31 {strides = array<i32>} : memref<16x16xf32, #tpu.memory_space<vmem>>, vector<16x16xf32>,
    return
  }
  func.func @transform_0(%arg0: i32) -> (i32, i32) {
    %c0_i32 = arith.constant 0 : i32
    %c0_i32_0 = arith.constant 0 : i32
    return %arg0, %c0_i32 : i32, i32
  }
  func.func @transform_1(%arg0: i32) -> (i32, i32) {
    %c0_i32 = arith.constant 0 : i32
    %c0_i32_0 = arith.constant 0 : i32
    %c0_i32_1 = arith.constant 0 : i32
    return %c0_i32, %c0_i32_0 : i32, i32
  }
  func.func @transform_2(%arg0: i32) -> (i32, i32) {
    %c0_i32 = arith.constant 0 : i32
    %c0_i32_0 = arith.constant 0 : i32
    %c0_i32_1 = arith.constant 0 : i32
    return %c0_i32, %c0_i32_0 : i32, i32
  }
  func.func @transform_3(%arg0: i32) -> (i32, i32) {
    %c0_i32 = arith.constant 0 : i32
    %c0_i32_0 = arith.constant 0 : i32
    %c0_i32_1 = arith.constant 0 : i32
    return %c0_i32, %c0_i32_0 : i32, i32
  }
  func.func @transform_4(%arg0: i32) -> (i32, i32) {
    %c0_i32 = arith.constant 0 : i32
    %c0_i32_0 = arith.constant 0 : i32
    %c0_i32_1 = arith.constant 0 : i32
    return %c0_i32, %c0_i32_0 : i32, i32
  }
  func.func @transform_5(%arg0: i32) -> (i32, i32) {
    %c0_i32 = arith.constant 0 : i32
    %c0_i32_0 = arith.constant 0 : i32
    %c0_i32_1 = arith.constant 0 : i32
    return %c0_i32, %c0_i32_0 : i32, i32
  }
  func.func @transform_6(%arg0: i32) -> (i32, i32) {
    %c0_i32 = arith.constant 0 : i32
    %c0_i32_0 = arith.constant 0 : i32
    %c0_i32_1 = arith.constant 0 : i32
    return %c0_i32, %c0_i32_0 : i32, i32
  }
  func.func @transform_7(%arg0: i32) -> (i32, i32) {
    %c0_i32 = arith.constant 0 : i32
    %c0_i32_0 = arith.constant 0 : i32
    %c0_i32_1 = arith.constant 0 : i32
    return %c0_i32, %c0_i32_0 : i32, i32
  }
  func.func @transform_8(%arg0: i32) -> (i32, i32) {
    %c0_i32 = arith.constant 0 : i32
    %c0_i32_0 = arith.constant 0 : i32
    %c0_i32_1 = arith.constant 0 : i32
    return %c0_i32, %c0_i32_0 : i32, i32
  }
  func.func @transform_9(%arg0: i32) -> (i32, i32) {
    %c0_i32 = arith.constant 0 : i32
    %c0_i32_0 = arith.constant 0 : i32
    return %arg0, %c0_i32 : i32, i32
  }
}

</mosaic_0001>

<llo_original>
// kernel: tpu_custom_call.1
$region0: #{tpu_custom_call.1}
  #allocation0 [shape = 'u32[]', space=smem, size = 0x4, offset = 0x4, fixed_abs, tag = 'smem constant byte address 0x4 - core index']
  #allocation1 [shape = 'u32[144,128]{1,0:T(1,128)}', space=vmem, size = 0x12000, scoped, tag = 'internal scratch']
  %s0 = inlined_call_operand.vmem [shape: bf16[16,32], index: 0, kind: input, shape index: {}]
  %s1 = inlined_call_operand.hbm [shape: bf16[32,128], index: 1, kind: input, shape index: {}]
  %s2 = inlined_call_operand.vmem [shape: f32[1,128], index: 2, kind: input, shape index: {}]
  %s3 = inlined_call_operand.vmem [shape: bf16[128,128], index: 3, kind: input, shape index: {}]
  %s4 = inlined_call_operand.vmem [shape: f32[1,128], index: 4, kind: input, shape index: {}]
  %s5 = inlined_call_operand.hbm [shape: bf16[128,128], index: 5, kind: input, shape index: {}]
  %s6 = inlined_call_operand.vmem [shape: f32[1,128], index: 6, kind: input, shape index: {}]
  %s7 = inlined_call_operand.vmem [shape: bf16[128,16], index: 7, kind: input, shape index: {}]
  %s8 = inlined_call_operand.vmem [shape: f32[1,16], index: 8, kind: input, shape index: {}]
  %s9 = inlined_call_operand.hbm [shape: f32[16,16], index: 9, kind: output, shape index: {}]
  %s10 = sld [smem:[#allocation0]]
  $region54: #{tpu_custom_call.1} parent=0
    _
  %s12 = ssub.s32 1, %s10
  %s13 = scalar_select 0, %s12, %s10
  $region1: #{tpu_custom_call.1} parent=0
    #allocation2 [shape = 'u8[8192]{0}', space=vmem, size = 0x2000, scoped, tag = 'input window, operand 1, single buffered']
    #allocation3 [shape = 's32[1]{0}', space=sflag, size = 0x4, scoped, tag = 'scoped memory for tpu_custom_call.1']
    #allocation4 [shape = 's32[1]{0}', space=sflag, size = 0x4, scoped, tag = 'scoped memory for tpu_custom_call.1']
    #allocation5 [shape = 'u8[32768]{0}', space=vmem, size = 0x8000, scoped, tag = 'input window, operand 5, single buffered']
    #allocation6 [shape = 's32[1]{0}', space=sflag, size = 0x4, scoped, tag = 'scoped memory for tpu_custom_call.1']
    #allocation7 [shape = 'u8[8192]{0}', space=vmem, size = 0x2000, scoped, tag = 'output window, operand 0, single buffered']
    %14 = vsyncpa [#allocation3], 0
    %15 = vsyncpa [#allocation6], 0
    %16 = vsyncpa [#allocation4], 0
    // Predicated region
    $region2: #{tpu_custom_call.1} parent=1 // pred_check
      _
    $region3: #{tpu_custom_call.1} parent=1 // pred_check_branch
      %18 = sbr.rel (0) target = $region5
    $region4: #{tpu_custom_call.1} parent=1 // pred_region
      _
    $region5: #{tpu_custom_call.1} parent=1 // pred_fallthru
      _
    // Predicated region
    $region6: #{tpu_custom_call.1} parent=1 // pred_check
      _
    $region7: #{tpu_custom_call.1} parent=1 // pred_check_branch
      %20 = sbr.rel (0) target = $region9
    $region8: #{tpu_custom_call.1} parent=1 // pred_region
      %s22 = ssub.s32 256, 256
      %23 = vsyncadd [#allocation3], %s22
      %s24 = sshll.u32 [#allocation2], 4
      %s25 = int_to_ptr.vmem [resolvable:$true] %s24
      %30 = dma.hbm_to_vmem [thread:$0]  %s1, 256, %s25, [#allocation3], 64, 64, 4
    $region9: #{tpu_custom_call.1} parent=1 // pred_fallthru
      _
    // Predicated region
    $region10: #{tpu_custom_call.1} parent=1 // pred_check
      _
    $region11: #{tpu_custom_call.1} parent=1 // pred_check_branch
      %32 = sbr.rel (0) target = $region13
    $region12: #{tpu_custom_call.1} parent=1 // pred_region
      _
    $region13: #{tpu_custom_call.1} parent=1 // pred_fallthru
      _
    // Predicated region
    $region14: #{tpu_custom_call.1} parent=1 // pred_check
      _
    $region15: #{tpu_custom_call.1} parent=1 // pred_check_branch
      %34 = sbr.rel (0) target = $region17
    $region16: #{tpu_custom_call.1} parent=1 // pred_region
      _
    $region17: #{tpu_custom_call.1} parent=1 // pred_fallthru
      _
    // Predicated region
    $region18: #{tpu_custom_call.1} parent=1 // pred_check
      _
    $region19: #{tpu_custom_call.1} parent=1 // pred_check_branch
      %36 = sbr.rel (0) target = $region21
    $region20: #{tpu_custom_call.1} parent=1 // pred_region
      _
    $region21: #{tpu_custom_call.1} parent=1 // pred_fallthru
      _
    // Predicated region
    $region22: #{tpu_custom_call.1} parent=1 // pred_check
      _
    $region23: #{tpu_custom_call.1} parent=1 // pred_check_branch
      %38 = sbr.rel (0) target = $region25
    $region24: #{tpu_custom_call.1} parent=1 // pred_region
      %s40 = ssub.s32 1024, 1024
      %41 = vsyncadd [#allocation6], %s40
      %s42 = sshll.u32 [#allocation5], 4
      %s43 = int_to_ptr.vmem [resolvable:$true] %s42
      %48 = dma.hbm_to_vmem [thread:$0]  %s5, 1024, %s43, [#allocation6], 64, 64, 4
    $region25: #{tpu_custom_call.1} parent=1 // pred_fallthru
      _
    // Predicated region
    $region26: #{tpu_custom_call.1} parent=1 // pred_check
      _
    $region27: #{tpu_custom_call.1} parent=1 // pred_check_branch
      %50 = sbr.rel (0) target = $region29
    $region28: #{tpu_custom_call.1} parent=1 // pred_region
      _
    $region29: #{tpu_custom_call.1} parent=1 // pred_fallthru
      _
    // Predicated region
    $region30: #{tpu_custom_call.1} parent=1 // pred_check
      _
    $region31: #{tpu_custom_call.1} parent=1 // pred_check_branch
      %52 = sbr.rel (0) target = $region33
    $region32: #{tpu_custom_call.1} parent=1 // pred_region
      _
    $region33: #{tpu_custom_call.1} parent=1 // pred_fallthru
      _
    // Predicated region
    $region34: #{tpu_custom_call.1} parent=1 // pred_check
      _
    $region35: #{tpu_custom_call.1} parent=1 // pred_check_branch
      %54 = sbr.rel (0) target = $region37
    $region36: #{tpu_custom_call.1} parent=1 // pred_region
      _
    $region37: #{tpu_custom_call.1} parent=1 // pred_fallthru
      _
    // Predicated region
    $region38: #{tpu_custom_call.1} parent=1 // pred_check
      _
    $region39: #{tpu_custom_call.1} parent=1 // pred_check_branch
      %56 = sbr.rel (0) target = $region41
    $region40: #{tpu_custom_call.1} parent=1 // pred_region
      %57 = dma.done [#allocation3], 256
    $region41: #{tpu_custom_call.1} parent=1 // pred_fallthru
      _
    // Predicated region
    $region42: #{tpu_custom_call.1} parent=1 // pred_check
      _
    $region43: #{tpu_custom_call.1} parent=1 // pred_check_branch
      %59 = sbr.rel (0) target = $region45
    $region44: #{tpu_custom_call.1} parent=1 // pred_region
      %60 = dma.done [#allocation6], 1024
    $region45: #{tpu_custom_call.1} parent=1 // pred_fallthru
      _
    %v62 = vld [vmem:[%s0] sm:$0xf]
    %v63 = vld [vmem:[%s0 + $0x4] sm:$0xf]
    %v64 = vld [vmem:[#allocation2] sm:$0xf]
    %v65 = vld [vmem:[#allocation2 + $0x4] sm:$0xf]
    %v66 = vld [vmem:[#allocation2 + $0x8] sm:$0xf]
    %v67 = vld [vmem:[#allocation2 + $0xc] sm:$0xf]
    %v68 = vld [vmem:[%s2] sm:$0x1]
    %v70 = vlaneseq
    %v71 = vshrl.u32 %v70, 7
    %v72 = vsub.s32 0, %v71
    %v73 = vrot.slane %v68, %v72
    %v77 = vunpack.c.l.b16 %v62
    %v78 = vunpack.c.l.b16 %v63
    %v79 = vpack.c.b16 %v78, %v77
    %v84 = vunpack.c.l.b16 %v64
    %v85 = vunpack.c.l.b16 %v65
    %v86 = vunpack.c.l.b16 %v66
    %v87 = vunpack.c.l.b16 %v67
    %v88 = vpack.c.b16 %v85, %v84
    %v89 = vpack.c.b16 %v87, %v86
    %vm92 = vcmask 261120
    %v94 = vsel %vm92, %v79, 0
    %96 = vmatprep.subr.bf16.mxu0 0
    %97 = vmatpush1.bf16.msra.mxu0 0
    %98 = vmatprep.subr.bf16.mxu0 0
    %99 = vmatpush1.bf16.msra.mxu0 0
    %100 = vmatprep.subr.bf16.mxu0 0
    %101 = vmatpush1.bf16.msra.mxu0 0
    %102 = vmatprep.subr.bf16.mxu0 0
    %103 = vmatpush1.bf16.msra.mxu0 0
    %104 = vmatprep.subr.bf16.mxu0 0
    %105 = vmatpush1.bf16.msra.mxu0 0
    %106 = vmatprep.subr.bf16.mxu0 0
    %107 = vmatpush1.bf16.msra.mxu0 0
    %108 = vmatprep.subr.bf16.mxu0 0
    %109 = vmatpush1.bf16.msra.mxu0 %v89
    %110 = vmatprep.subr.bf16.mxu0 0
    %111 = vmatpush1.bf16.msra.mxu0 %v88
    %112 = vmatprep.subr.bf16.mxu0 0
    %113 = vmatpush2.bf16.msra.mxu0 0
    %114 = vmatprep.subr.bf16.mxu0 0
    %115 = vmatpush2.bf16.msra.mxu0 0
    %116 = vmatprep.subr.bf16.mxu0 0
    %117 = vmatpush2.bf16.msra.mxu0 0
    %118 = vmatprep.subr.bf16.mxu0 0
    %119 = vmatpush2.bf16.msra.mxu0 0
    %120 = vmatprep.subr.bf16.mxu0 0
    %121 = vmatpush2.bf16.msra.mxu0 0
    %122 = vmatprep.subr.bf16.mxu0 0
    %123 = vmatpush2.bf16.msra.mxu0 0
    %124 = vmatprep.subr.bf16.mxu0 0
    %125 = vmatpush2.bf16.msra.mxu0 0
    %126 = vmatprep.subr.bf16.mxu0 0
    %127 = vmatpush2.bf16.msra.mxu0 0
    %128 = vmatprep.mubr.bf16.mxu0 0
    %129 = vmatmul.mubr.bf16.gmra.mxu0 %v94
    %v130 = vpop.f32.mrf.mxu0
    %v131 = vadd.f32 %v73, %v130
    %v132 = vpop.f32.mrf.mxu0
    %v133 = vpop.f32.mrf.mxu0
    %v134 = vadd.f32 %v73, %v133
    %v135 = vpop.f32.mrf.mxu0
    %136 = vdwg.mxu0
    %v137 = vmax.f32 %v131, 0.0
    %v138 = vmax.f32 %v134, 0.0
    %v139 = vpack.c.bf16 %v138, %v137
    %v140 = vld [vmem:[%s3] sm:$0xf]
    %v141 = vld [vmem:[%s3 + $0x4] sm:$0xf]
    %v142 = vld [vmem:[%s3 + $0x8] sm:$0xf]
    %v143 = vld [vmem:[%s3 + $0xc] sm:$0xf]
    %v144 = vld [vmem:[%s3 + $0x10] sm:$0xf]
    %v145 = vld [vmem:[%s3 + $0x14] sm:$0xf]
    %v146 = vld [vmem:[%s3 + $0x18] sm:$0xf]
    %v147 = vld [vmem:[%s3 + $0x1c] sm:$0xf]
    %v148 = vld [vmem:[%s3 + $0x20] sm:$0xf]
    %v149 = vld [vmem:[%s3 + $0x24] sm:$0xf]
    %v150 = vld [vmem:[%s3 + $0x28] sm:$0xf]
    %v151 = vld [vmem:[%s3 + $0x2c] sm:$0xf]
    %v152 = vld [vmem:[%s3 + $0x30] sm:$0xf]
    %v153 = vld [vmem:[%s3 + $0x34] sm:$0xf]
    %v154 = vld [vmem:[%s3 + $0x38] sm:$0xf]
    %v155 = vld [vmem:[%s3 + $0x3c] sm:$0xf]
    %v156 = vld [vmem:[%s4] sm:$0x1]
    %v158 = vlaneseq
    %v159 = vshrl.u32 %v158, 7
    %v160 = vsub.s32 0, %v159
    %v161 = vrot.slane %v156, %v160
    %v179 = vunpack.c.l.b16 %v140
    %v180 = vunpack.c.l.b16 %v141
    %v181 = vunpack.c.l.b16 %v142
    %v182 = vunpack.c.l.b16 %v143
    %v183 = vunpack.c.l.b16 %v144
    %v184 = vunpack.c.l.b16 %v145
    %v185 = vunpack.c.l.b16 %v146
    %v186 = vunpack.c.l.b16 %v147
    %v187 = vunpack.c.l.b16 %v148
    %v188 = vunpack.c.l.b16 %v149
    %v189 = vunpack.c.l.b16 %v150
    %v190 = vunpack.c.l.b16 %v151
    %v191 = vunpack.c.l.b16 %v152
    %v192 = vunpack.c.l.b16 %v153
    %v193 = vunpack.c.l.b16 %v154
    %v194 = vunpack.c.l.b16 %v155
    %v195 = vpack.c.b16 %v180, %v179
    %v196 = vpack.c.b16 %v182, %v181
    %v197 = vpack.c.b16 %v184, %v183
    %v198 = vpack.c.b16 %v186, %v185
    %v199 = vpack.c.b16 %v188, %v187
    %v200 = vpack.c.b16 %v190, %v189
    %v201 = vpack.c.b16 %v192, %v191
    %v202 = vpack.c.b16 %v194, %v193
    %211 = vmatprep.subr.bf16.mxu0 0
    %212 = vmatpush1.bf16.msra.mxu0 %v202
    %213 = vmatprep.subr.bf16.mxu0 0
    %214 = vmatpush1.bf16.msra.mxu0 %v201
    %215 = vmatprep.subr.bf16.mxu0 0
    %216 = vmatpush1.bf16.msra.mxu0 %v200
    %217 = vmatprep.subr.bf16.mxu0 0
    %218 = vmatpush1.bf16.msra.mxu0 %v199
    %219 = vmatprep.subr.bf16.mxu0 0
    %220 = vmatpush1.bf16.msra.mxu0 %v198
    %221 = vmatprep.subr.bf16.mxu0 0
    %222 = vmatpush1.bf16.msra.mxu0 %v197
    %223 = vmatprep.subr.bf16.mxu0 0
    %224 = vmatpush1.bf16.msra.mxu0 %v196
    %225 = vmatprep.subr.bf16.mxu0 0
    %226 = vmatpush1.bf16.msra.mxu0 %v195
    %227 = vmatprep.subr.bf16.mxu0 0
    %228 = vmatpush2.bf16.msra.mxu0 0
    %229 = vmatprep.subr.bf16.mxu0 0
    %230 = vmatpush2.bf16.msra.mxu0 0
    %231 = vmatprep.subr.bf16.mxu0 0
    %232 = vmatpush2.bf16.msra.mxu0 0
    %233 = vmatprep.subr.bf16.mxu0 0
    %234 = vmatpush2.bf16.msra.mxu0 0
    %235 = vmatprep.subr.bf16.mxu0 0
    %236 = vmatpush2.bf16.msra.mxu0 0
    %237 = vmatprep.subr.bf16.mxu0 0
    %238 = vmatpush2.bf16.msra.mxu0 0
    %239 = vmatprep.subr.bf16.mxu0 0
    %240 = vmatpush2.bf16.msra.mxu0 0
    %241 = vmatprep.subr.bf16.mxu0 0
    %242 = vmatpush2.bf16.msra.mxu0 0
    %243 = vmatprep.mubr.bf16.mxu0 0
    %244 = vmatmul.mubr.bf16.gmra.mxu0 %v139
    %v245 = vpop.f32.mrf.mxu0
    %v246 = vadd.f32 %v161, %v245
    %v247 = vpop.f32.mrf.mxu0
    %v248 = vpop.f32.mrf.mxu0
    %v249 = vadd.f32 %v161, %v248
    %v250 = vpop.f32.mrf.mxu0
    %251 = vdwg.mxu0
    %v252 = vmax.f32 %v246, 0.0
    %v253 = vmax.f32 %v249, 0.0
    %v254 = vpack.c.bf16 %v253, %v252
    %v255 = vld [vmem:[#allocation5] sm:$0xf]
    %v256 = vld [vmem:[#allocation5 + $0x4] sm:$0xf]
    %v257 = vld [vmem:[#allocation5 + $0x8] sm:$0xf]
    %v258 = vld [vmem:[#allocation5 + $0xc] sm:$0xf]
    %v259 = vld [vmem:[#allocation5 + $0x10] sm:$0xf]
    %v260 = vld [vmem:[#allocation5 + $0x14] sm:$0xf]
    %v261 = vld [vmem:[#allocation5 + $0x18] sm:$0xf]
    %v262 = vld [vmem:[#allocation5 + $0x1c] sm:$0xf]
    %v263 = vld [vmem:[#allocation5 + $0x20] sm:$0xf]
    %v264 = vld [vmem:[#allocation5 + $0x24] sm:$0xf]
    %v265 = vld [vmem:[#allocation5 + $0x28] sm:$0xf]
    %v266 = vld [vmem:[#allocation5 + $0x2c] sm:$0xf]
    %v267 = vld [vmem:[#allocation5 + $0x30] sm:$0xf]
    %v268 = vld [vmem:[#allocation5 + $0x34] sm:$0xf]
    %v269 = vld [vmem:[#allocation5 + $0x38] sm:$0xf]
    %v270 = vld [vmem:[#allocation5 + $0x3c] sm:$0xf]
    %v271 = vld [vmem:[%s6] sm:$0x1]
    %v273 = vlaneseq
    %v274 = vshrl.u32 %v273, 7
    %v275 = vsub.s32 0, %v274
    %v276 = vrot.slane %v271, %v275
    %v294 = vunpack.c.l.b16 %v255
    %v295 = vunpack.c.l.b16 %v256
    %v296 = vunpack.c.l.b16 %v257
    %v297 = vunpack.c.l.b16 %v258
    %v298 = vunpack.c.l.b16 %v259
    %v299 = vunpack.c.l.b16 %v260
    %v300 = vunpack.c.l.b16 %v261
    %v301 = vunpack.c.l.b16 %v262
    %v302 = vunpack.c.l.b16 %v263
    %v303 = vunpack.c.l.b16 %v264
    %v304 = vunpack.c.l.b16 %v265
    %v305 = vunpack.c.l.b16 %v266
    %v306 = vunpack.c.l.b16 %v267
    %v307 = vunpack.c.l.b16 %v268
    %v308 = vunpack.c.l.b16 %v269
    %v309 = vunpack.c.l.b16 %v270
    %v310 = vpack.c.b16 %v295, %v294
    %v311 = vpack.c.b16 %v297, %v296
    %v312 = vpack.c.b16 %v299, %v298
    %v313 = vpack.c.b16 %v301, %v300
    %v314 = vpack.c.b16 %v303, %v302
    %v315 = vpack.c.b16 %v305, %v304
    %v316 = vpack.c.b16 %v307, %v306
    %v317 = vpack.c.b16 %v309, %v308
    %326 = vmatprep.subr.bf16.mxu0 0
    %327 = vmatpush1.bf16.msra.mxu0 %v317
    %328 = vmatprep.subr.bf16.mxu0 0
    %329 = vmatpush1.bf16.msra.mxu0 %v316
    %330 = vmatprep.subr.bf16.mxu0 0
    %331 = vmatpush1.bf16.msra.mxu0 %v315
    %332 = vmatprep.subr.bf16.mxu0 0
    %333 = vmatpush1.bf16.msra.mxu0 %v314
    %334 = vmatprep.subr.bf16.mxu0 0
    %335 = vmatpush1.bf16.msra.mxu0 %v313
    %336 = vmatprep.subr.bf16.mxu0 0
    %337 = vmatpush1.bf16.msra.mxu0 %v312
    %338 = vmatprep.subr.bf16.mxu0 0
    %339 = vmatpush1.bf16.msra.mxu0 %v311
    %340 = vmatprep.subr.bf16.mxu0 0
    %341 = vmatpush1.bf16.msra.mxu0 %v310
    %342 = vmatprep.subr.bf16.mxu0 0
    %343 = vmatpush2.bf16.msra.mxu0 0
    %344 = vmatprep.subr.bf16.mxu0 0
    %345 = vmatpush2.bf16.msra.mxu0 0
    %346 = vmatprep.subr.bf16.mxu0 0
    %347 = vmatpush2.bf16.msra.mxu0 0
    %348 = vmatprep.subr.bf16.mxu0 0
    %349 = vmatpush2.bf16.msra.mxu0 0
    %350 = vmatprep.subr.bf16.mxu0 0
    %351 = vmatpush2.bf16.msra.mxu0 0
    %352 = vmatprep.subr.bf16.mxu0 0
    %353 = vmatpush2.bf16.msra.mxu0 0
    %354 = vmatprep.subr.bf16.mxu0 0
    %355 = vmatpush2.bf16.msra.mxu0 0
    %356 = vmatprep.subr.bf16.mxu0 0
    %357 = vmatpush2.bf16.msra.mxu0 0
    %358 = vmatprep.mubr.bf16.mxu0 0
    %359 = vmatmul.mubr.bf16.gmra.mxu0 %v254
    %v360 = vpop.f32.mrf.mxu0
    %v361 = vadd.f32 %v276, %v360
    %v362 = vpop.f32.mrf.mxu0
    %v363 = vpop.f32.mrf.mxu0
    %v364 = vadd.f32 %v276, %v363
    %v365 = vpop.f32.mrf.mxu0
    %366 = vdwg.mxu0
    %v367 = vmax.f32 %v361, 0.0
    %v368 = vmax.f32 %v364, 0.0
    %v369 = vpack.c.bf16 %v368, %v367
    %v370 = vld [vmem:[%s7] sm:$0xf]
    %v371 = vld [vmem:[%s7 + $0x4] sm:$0xf]
    %v372 = vld [vmem:[%s7 + $0x8] sm:$0xf]
    %v373 = vld [vmem:[%s7 + $0xc] sm:$0xf]
    %v374 = vld [vmem:[%s7 + $0x10] sm:$0xf]
    %v375 = vld [vmem:[%s7 + $0x14] sm:$0xf]
    %v376 = vld [vmem:[%s7 + $0x18] sm:$0xf]
    %v377 = vld [vmem:[%s7 + $0x1c] sm:$0xf]
    %v378 = vld [vmem:[%s7 + $0x20] sm:$0xf]
    %v379 = vld [vmem:[%s7 + $0x24] sm:$0xf]
    %v380 = vld [vmem:[%s7 + $0x28] sm:$0xf]
    %v381 = vld [vmem:[%s7 + $0x2c] sm:$0xf]
    %v382 = vld [vmem:[%s7 + $0x30] sm:$0xf]
    %v383 = vld [vmem:[%s7 + $0x34] sm:$0xf]
    %v384 = vld [vmem:[%s7 + $0x38] sm:$0xf]
    %v385 = vld [vmem:[%s7 + $0x3c] sm:$0xf]
    %v386 = vld [vmem:[%s8] sm:$0x1]
    %v388 = vlaneseq
    %v389 = vshrl.u32 %v388, 7
    %v390 = vsub.s32 0, %v389
    %v391 = vrot.slane %v386, %v390
    %v409 = vunpack.c.l.b16 %v370
    %v410 = vunpack.c.l.b16 %v371
    %v411 = vunpack.c.l.b16 %v372
    %v412 = vunpack.c.l.b16 %v373
    %v413 = vunpack.c.l.b16 %v374
    %v414 = vunpack.c.l.b16 %v375
    %v415 = vunpack.c.l.b16 %v376
    %v416 = vunpack.c.l.b16 %v377
    %v417 = vunpack.c.l.b16 %v378
    %v418 = vunpack.c.l.b16 %v379
    %v419 = vunpack.c.l.b16 %v380
    %v420 = vunpack.c.l.b16 %v381
    %v421 = vunpack.c.l.b16 %v382
    %v422 = vunpack.c.l.b16 %v383
    %v423 = vunpack.c.l.b16 %v384
    %v424 = vunpack.c.l.b16 %v385
    %v425 = vpack.c.b16 %v410, %v409
    %v426 = vpack.c.b16 %v412, %v411
    %v427 = vpack.c.b16 %v414, %v413
    %v428 = vpack.c.b16 %v416, %v415
    %v429 = vpack.c.b16 %v418, %v417
    %v430 = vpack.c.b16 %v420, %v419
    %v431 = vpack.c.b16 %v422, %v421
    %v432 = vpack.c.b16 %v424, %v423
    %441 = vmatprep.subr.bf16.mxu0 0
    %442 = vmatpush1.bf16.msra.mxu0 %v432
    %443 = vmatprep.subr.bf16.mxu0 0
    %444 = vmatpush1.bf16.msra.mxu0 %v431
    %445 = vmatprep.subr.bf16.mxu0 0
    %446 = vmatpush1.bf16.msra.mxu0 %v430
    %447 = vmatprep.subr.bf16.mxu0 0
    %448 = vmatpush1.bf16.msra.mxu0 %v429
    %449 = vmatprep.subr.bf16.mxu0 0
    %450 = vmatpush1.bf16.msra.mxu0 %v428
    %451 = vmatprep.subr.bf16.mxu0 0
    %452 = vmatpush1.bf16.msra.mxu0 %v427
    %453 = vmatprep.subr.bf16.mxu0 0
    %454 = vmatpush1.bf16.msra.mxu0 %v426
    %455 = vmatprep.subr.bf16.mxu0 0
    %456 = vmatpush1.bf16.msra.mxu0 %v425
    %457 = vmatprep.subr.bf16.mxu0 0
    %458 = vmatpush2.bf16.msra.mxu0 0
    %459 = vmatprep.subr.bf16.mxu0 0
    %460 = vmatpush2.bf16.msra.mxu0 0
    %461 = vmatprep.subr.bf16.mxu0 0
    %462 = vmatpush2.bf16.msra.mxu0 0
    %463 = vmatprep.subr.bf16.mxu0 0
    %464 = vmatpush2.bf16.msra.mxu0 0
    %465 = vmatprep.subr.bf16.mxu0 0
    %466 = vmatpush2.bf16.msra.mxu0 0
    %467 = vmatprep.subr.bf16.mxu0 0
    %468 = vmatpush2.bf16.msra.mxu0 0
    %469 = vmatprep.subr.bf16.mxu0 0
    %470 = vmatpush2.bf16.msra.mxu0 0
    %471 = vmatprep.subr.bf16.mxu0 0
    %472 = vmatpush2.bf16.msra.mxu0 0
    %473 = vmatprep.mubr.bf16.mxu0 0
    %474 = vmatmul.mubr.bf16.gmra.mxu0 %v369
    %v475 = vpop.f32.mrf.mxu0
    %v476 = vadd.f32 %v391, %v475
    %v477 = vpop.f32.mrf.mxu0
    %v478 = vpop.f32.mrf.mxu0
    %v479 = vadd.f32 %v391, %v478
    %v480 = vpop.f32.mrf.mxu0
    %481 = vdwg.mxu0
    %v482 = vmax.f32 %v476, 0.0
    %v483 = vmax.f32 %v479, 0.0
    %vm484 = vcmask 130048
    %485 = vst.msk [vmem:[#allocation7] sm:$0xff] %vm484, %v482
    %486 = vst.msk [vmem:[#allocation7 + $0x8] sm:$0xff] %vm484, %v483
    // Predicated region
    $region46: #{tpu_custom_call.1} parent=1 // pred_check
      _
    $region47: #{tpu_custom_call.1} parent=1 // pred_check_branch
      %488 = sbr.rel (0) target = $region49
    $region48: #{tpu_custom_call.1} parent=1 // pred_region
      %s490 = ssub.s32 256, 256
      %491 = vsyncadd [#allocation4], %s490
      %s492 = sshll.u32 [#allocation7], 4
      %s493 = int_to_ptr.vmem [resolvable:$true] %s492
      %498 = dma.vmem_to_hbm [thread:$0]  %s493, 256, %s9, [#allocation4], 128, 128, 8
    $region49: #{tpu_custom_call.1} parent=1 // pred_fallthru
      _
    // Predicated region
    $region50: #{tpu_custom_call.1} parent=1 // pred_check
      _
    $region51: #{tpu_custom_call.1} parent=1 // pred_check_branch
      %500 = sbr.rel (0) target = $region53
    $region52: #{tpu_custom_call.1} parent=1 // pred_region
      %501 = dma.done [#allocation4], 256
    $region53: #{tpu_custom_call.1} parent=1 // pred_fallthru
      _
    %502 = vsyncpa [#allocation3], 1
    %503 = vsyncpa [#allocation6], 1
    %504 = vsyncpa [#allocation4], 1

// kernel: tpu_custom_call.1
$region0: #{tpu_custom_call.1}
  #allocation0 [shape = 'u32[]', space=smem, size = 0x4, offset = 0x4, fixed_abs, tag = 'smem constant byte address 0x4 - core index']
  #allocation1 [shape = 'u32[144,128]{1,0:T(1,128)}', space=vmem, size = 0x12000, scoped, tag = 'internal scratch']
  %s0 = inlined_call_operand.vmem [shape: bf16[16,32], index: 0, kind: input, shape index: {}]
  %s1 = inlined_call_operand.hbm [shape: bf16[32,128], index: 1, kind: input, shape index: {}]
  %s2 = inlined_call_operand.vmem [shape: f32[1,128], index: 2, kind: input, shape index: {}]
  %s3 = inlined_call_operand.vmem [shape: bf16[128,128], index: 3, kind: input, shape index: {}]
  %s4 = inlined_call_operand.vmem [shape: f32[1,128], index: 4, kind: input, shape index: {}]
  %s5 = inlined_call_operand.hbm [shape: bf16[128,128], index: 5, kind: input, shape index: {}]
  %s6 = inlined_call_operand.vmem [shape: f32[1,128], index: 6, kind: input, shape index: {}]
  %s7 = inlined_call_operand.vmem [shape: bf16[128,16], index: 7, kind: input, shape index: {}]
  %s8 = inlined_call_operand.vmem [shape: f32[1,16], index: 8, kind: input, shape index: {}]
  %s9 = inlined_call_operand.hbm [shape: f32[16,16], index: 9, kind: output, shape index: {}]
  %s10 = sld [smem:[#allocation0]]
  $region54: #{tpu_custom_call.1} parent=0
    _
  %s12 = ssub.s32 1, %s10
  %s13 = scalar_select 0, %s12, %s10
  $region1: #{tpu_custom_call.1} parent=0
    #allocation2 [shape = 'u8[8192]{0}', space=vmem, size = 0x2000, scoped, tag = 'input window, operand 1, single buffered']
    #allocation3 [shape = 's32[1]{0}', space=sflag, size = 0x4, scoped, tag = 'scoped memory for tpu_custom_call.1']
    #allocation4 [shape = 's32[1]{0}', space=sflag, size = 0x4, scoped, tag = 'scoped memory for tpu_custom_call.1']
    #allocation5 [shape = 'u8[32768]{0}', space=vmem, size = 0x8000, scoped, tag = 'input window, operand 5, single buffered']
    #allocation6 [shape = 's32[1]{0}', space=sflag, size = 0x4, scoped, tag = 'scoped memory for tpu_custom_call.1']
    #allocation7 [shape = 'u8[8192]{0}', space=vmem, size = 0x2000, scoped, tag = 'output window, operand 0, single buffered']
    %14 = vsyncpa [#allocation3], 0
    %15 = vsyncpa [#allocation6], 0
    %16 = vsyncpa [#allocation4], 0
    // Predicated region
    $region2: #{tpu_custom_call.1} parent=1 // pred_check
      _
    $region3: #{tpu_custom_call.1} parent=1 // pred_check_branch
      %18 = sbr.rel (0) target = $region5
    $region4: #{tpu_custom_call.1} parent=1 // pred_region
      _
    $region5: #{tpu_custom_call.1} parent=1 // pred_fallthru
      _
    // Predicated region
    $region6: #{tpu_custom_call.1} parent=1 // pred_check
      _
    $region7: #{tpu_custom_call.1} parent=1 // pred_check_branch
      %20 = sbr.rel (0) target = $region9
    $region8: #{tpu_custom_call.1} parent=1 // pred_region
      %s22 = ssub.s32 256, 256
      %23 = vsyncadd [#allocation3], %s22
      %s24 = sshll.u32 [#allocation2], 4
      %s25 = int_to_ptr.vmem [resolvable:$true] %s24
      %30 = dma.hbm_to_vmem [thread:$0]  %s1, 256, %s25, [#allocation3], 64, 64, 4
    $region9: #{tpu_custom_call.1} parent=1 // pred_fallthru
      _
    // Predicated region
    $region10: #{tpu_custom_call.1} parent=1 // pred_check
      _
    $region11: #{tpu_custom_call.1} parent=1 // pred_check_branch
      %32 = sbr.rel (0) target = $region13
    $region12: #{tpu_custom_call.1} parent=1 // pred_region
      _
    $region13: #{tpu_custom_call.1} parent=1 // pred_fallthru
      _
    // Predicated region
    $region14: #{tpu_custom_call.1} parent=1 // pred_check
      _
    $region15: #{tpu_custom_call.1} parent=1 // pred_check_branch
      %34 = sbr.rel (0) target = $region17
    $region16: #{tpu_custom_call.1} parent=1 // pred_region
      _
    $region17: #{tpu_custom_call.1} parent=1 // pred_fallthru
      _
    // Predicated region
    $region18: #{tpu_custom_call.1} parent=1 // pred_check
      _
    $region19: #{tpu_custom_call.1} parent=1 // pred_check_branch
      %36 = sbr.rel (0) target = $region21
    $region20: #{tpu_custom_call.1} parent=1 // pred_region
      _
    $region21: #{tpu_custom_call.1} parent=1 // pred_fallthru
      _
    // Predicated region
    $region22: #{tpu_custom_call.1} parent=1 // pred_check
      _
    $region23: #{tpu_custom_call.1} parent=1 // pred_check_branch
      %38 = sbr.rel (0) target = $region25
    $region24: #{tpu_custom_call.1} parent=1 // pred_region
      %s40 = ssub.s32 1024, 1024
      %41 = vsyncadd [#allocation6], %s40
      %s42 = sshll.u32 [#allocation5], 4
      %s43 = int_to_ptr.vmem [resolvable:$true] %s42
      %48 = dma.hbm_to_vmem [thread:$0]  %s5, 1024, %s43, [#allocation6], 64, 64, 4
    $region25: #{tpu_custom_call.1} parent=1 // pred_fallthru
      _
    // Predicated region
    $region26: #{tpu_custom_call.1} parent=1 // pred_check
      _
    $region27: #{tpu_custom_call.1} parent=1 // pred_check_branch
      %50 = sbr.rel (0) target = $region29
    $region28: #{tpu_custom_call.1} parent=1 // pred_region
      _
    $region29: #{tpu_custom_call.1} parent=1 // pred_fallthru
      _
    // Predicated region
    $region30: #{tpu_custom_call.1} parent=1 // pred_check
      _
    $region31: #{tpu_custom_call.1} parent=1 // pred_check_branch
      %52 = sbr.rel (0) target = $region33
    $region32: #{tpu_custom_call.1} parent=1 // pred_region
      _
    $region33: #{tpu_custom_call.1} parent=1 // pred_fallthru
      _
    // Predicated region
    $region34: #{tpu_custom_call.1} parent=1 // pred_check
      _
    $region35: #{tpu_custom_call.1} parent=1 // pred_check_branch
      %54 = sbr.rel (0) target = $region37
    $region36: #{tpu_custom_call.1} parent=1 // pred_region
      _
    $region37: #{tpu_custom_call.1} parent=1 // pred_fallthru
      _
    // Predicated region
    $region38: #{tpu_custom_call.1} parent=1 // pred_check
      _
    $region39: #{tpu_custom_call.1} parent=1 // pred_check_branch
      %56 = sbr.rel (0) target = $region41
    $region40: #{tpu_custom_call.1} parent=1 // pred_region
      %57 = dma.done [#allocation3], 256
    $region41: #{tpu_custom_call.1} parent=1 // pred_fallthru
      _
    // Predicated region
    $region42: #{tpu_custom_call.1} parent=1 // pred_check
      _
    $region43: #{tpu_custom_call.1} parent=1 // pred_check_branch
      %59 = sbr.rel (0) target = $region45
    $region44: #{tpu_custom_call.1} parent=1 // pred_region
      %60 = dma.done [#allocation6], 1024
    $region45: #{tpu_custom_call.1} parent=1 // pred_fallthru
      _
    %v62 = vld [vmem:[%s0] sm:$0xf]
    %v63 = vld [vmem:[%s0 + $0x4] sm:$0xf]
    %v64 = vld [vmem:[#allocation2] sm:$0xf]
    %v65 = vld [vmem:[#allocation2 + $0x4] sm:$0xf]
    %v66 = vld [vmem:[#allocation2 + $0x8] sm:$0xf]
    %v67 = vld [vmem:[#allocation2 + $0xc] sm:$0xf]
    %v68 = vld [vmem:[%s2] sm:$0x1]
    %v70 = vlaneseq
    %v71 = vshrl.u32 %v70, 7
    %v72 = vsub.s32 0, %v71
    %v73 = vrot.slane %v68, %v72
    %v77 = vunpack.c.l.b16 %v62
    %v78 = vunpack.c.l.b16 %v63
    %v79 = vpack.c.b16 %v78, %v77
    %v84 = vunpack.c.l.b16 %v64
    %v85 = vunpack.c.l.b16 %v65
    %v86 = vunpack.c.l.b16 %v66
    %v87 = vunpack.c.l.b16 %v67
    %v88 = vpack.c.b16 %v85, %v84
    %v89 = vpack.c.b16 %v87, %v86
    %vm92 = vcmask 261120
    %v94 = vsel %vm92, %v79, 0
    %96 = vmatprep.subr.bf16.mxu0 0
    %97 = vmatpush1.bf16.msra.mxu0 0
    %98 = vmatprep.subr.bf16.mxu0 0
    %99 = vmatpush1.bf16.msra.mxu0 0
    %100 = vmatprep.subr.bf16.mxu0 0
    %101 = vmatpush1.bf16.msra.mxu0 0
    %102 = vmatprep.subr.bf16.mxu0 0
    %103 = vmatpush1.bf16.msra.mxu0 0
    %104 = vmatprep.subr.bf16.mxu0 0
    %105 = vmatpush1.bf16.msra.mxu0 0
    %106 = vmatprep.subr.bf16.mxu0 0
    %107 = vmatpush1.bf16.msra.mxu0 0
    %108 = vmatprep.subr.bf16.mxu0 0
    %109 = vmatpush1.bf16.msra.mxu0 %v89
    %110 = vmatprep.subr.bf16.mxu0 0
    %111 = vmatpush1.bf16.msra.mxu0 %v88
    %112 = vmatprep.subr.bf16.mxu0 0
    %113 = vmatpush2.bf16.msra.mxu0 0
    %114 = vmatprep.subr.bf16.mxu0 0
    %115 = vmatpush2.bf16.msra.mxu0 0
    %116 = vmatprep.subr.bf16.mxu0 0
    %117 = vmatpush2.bf16.msra.mxu0 0
    %118 = vmatprep.subr.bf16.mxu0 0
    %119 = vmatpush2.bf16.msra.mxu0 0
    %120 = vmatprep.subr.bf16.mxu0 0
    %121 = vmatpush2.bf16.msra.mxu0 0
    %122 = vmatprep.subr.bf16.mxu0 0
    %123 = vmatpush2.bf16.msra.mxu0 0
    %124 = vmatprep.subr.bf16.mxu0 0
    %125 = vmatpush2.bf16.msra.mxu0 0
    %126 = vmatprep.subr.bf16.mxu0 0
    %127 = vmatpush2.bf16.msra.mxu0 0
    %128 = vmatprep.mubr.bf16.mxu0 0
    %129 = vmatmul.mubr.bf16.gmra.mxu0 %v94
    %v130 = vpop.f32.mrf.mxu0
    %v131 = vadd.f32 %v73, %v130
    %v132 = vpop.f32.mrf.mxu0
    %v133 = vpop.f32.mrf.mxu0
    %v134 = vadd.f32 %v73, %v133
    %v135 = vpop.f32.mrf.mxu0
    %136 = vdwg.mxu0
    %v137 = vmax.f32 %v131, 0.0
    %v138 = vmax.f32 %v134, 0.0
    %v139 = vpack.c.bf16 %v138, %v137
    %v140 = vld [vmem:[%s3] sm:$0xf]
    %v141 = vld [vmem:[%s3 + $0x4] sm:$0xf]
    %v142 = vld [vmem:[%s3 + $0x8] sm:$0xf]
    %v143 = vld [vmem:[%s3 + $0xc] sm:$0xf]
    %v144 = vld [vmem:[%s3 + $0x10] sm:$0xf]
    %v145 = vld [vmem:[%s3 + $0x14] sm:$0xf]
    %v146 = vld [vmem:[%s3 + $0x18] sm:$0xf]
    %v147 = vld [vmem:[%s3 + $0x1c] sm:$0xf]
    %v148 = vld [vmem:[%s3 + $0x20] sm:$0xf]
    %v149 = vld [vmem:[%s3 + $0x24] sm:$0xf]
    %v150 = vld [vmem:[%s3 + $0x28] sm:$0xf]
    %v151 = vld [vmem:[%s3 + $0x2c] sm:$0xf]
    %v152 = vld [vmem:[%s3 + $0x30] sm:$0xf]
    %v153 = vld [vmem:[%s3 + $0x34] sm:$0xf]
    %v154 = vld [vmem:[%s3 + $0x38] sm:$0xf]
    %v155 = vld [vmem:[%s3 + $0x3c] sm:$0xf]
    %v156 = vld [vmem:[%s4] sm:$0x1]
    %v158 = vlaneseq
    %v159 = vshrl.u32 %v158, 7
    %v160 = vsub.s32 0, %v159
    %v161 = vrot.slane %v156, %v160
    %v179 = vunpack.c.l.b16 %v140
    %v180 = vunpack.c.l.b16 %v141
    %v181 = vunpack.c.l.b16 %v142
    %v182 = vunpack.c.l.b16 %v143
    %v183 = vunpack.c.l.b16 %v144
    %v184 = vunpack.c.l.b16 %v145
    %v185 = vunpack.c.l.b16 %v146
    %v186 = vunpack.c.l.b16 %v147
    %v187 = vunpack.c.l.b16 %v148
    %v188 = vunpack.c.l.b16 %v149
    %v189 = vunpack.c.l.b16 %v150
    %v190 = vunpack.c.l.b16 %v151
    %v191 = vunpack.c.l.b16 %v152
    %v192 = vunpack.c.l.b16 %v153
    %v193 = vunpack.c.l.b16 %v154
    %v194 = vunpack.c.l.b16 %v155
    %v195 = vpack.c.b16 %v180, %v179
    %v196 = vpack.c.b16 %v182, %v181
    %v197 = vpack.c.b16 %v184, %v183
    %v198 = vpack.c.b16 %v186, %v185
    %v199 = vpack.c.b16 %v188, %v187
    %v200 = vpack.c.b16 %v190, %v189
    %v201 = vpack.c.b16 %v192, %v191
    %v202 = vpack.c.b16 %v194, %v193
    %211 = vmatprep.subr.bf16.mxu0 0
    %212 = vmatpush1.bf16.msra.mxu0 %v202
    %213 = vmatprep.subr.bf16.mxu0 0
    %214 = vmatpush1.bf16.msra.mxu0 %v201
    %215 = vmatprep.subr.bf16.mxu0 0
    %216 = vmatpush1.bf16.msra.mxu0 %v200
    %217 = vmatprep.subr.bf16.mxu0 0
    %218 = vmatpush1.bf16.msra.mxu0 %v199
    %219 = vmatprep.subr.bf16.mxu0 0
    %220 = vmatpush1.bf16.msra.mxu0 %v198
    %221 = vmatprep.subr.bf16.mxu0 0
    %222 = vmatpush1.bf16.msra.mxu0 %v197
    %223 = vmatprep.subr.bf16.mxu0 0
    %224 = vmatpush1.bf16.msra.mxu0 %v196
    %225 = vmatprep.subr.bf16.mxu0 0
    %226 = vmatpush1.bf16.msra.mxu0 %v195
    %227 = vmatprep.subr.bf16.mxu0 0
    %228 = vmatpush2.bf16.msra.mxu0 0
    %229 = vmatprep.subr.bf16.mxu0 0
    %230 = vmatpush2.bf16.msra.mxu0 0
    %231 = vmatprep.subr.bf16.mxu0 0
    %232 = vmatpush2.bf16.msra.mxu0 0
    %233 = vmatprep.subr.bf16.mxu0 0
    %234 = vmatpush2.bf16.msra.mxu0 0
    %235 = vmatprep.subr.bf16.mxu0 0
    %236 = vmatpush2.bf16.msra.mxu0 0
    %237 = vmatprep.subr.bf16.mxu0 0
    %238 = vmatpush2.bf16.msra.mxu0 0
    %239 = vmatprep.subr.bf16.mxu0 0
    %240 = vmatpush2.bf16.msra.mxu0 0
    %241 = vmatprep.subr.bf16.mxu0 0
    %242 = vmatpush2.bf16.msra.mxu0 0
    %243 = vmatprep.mubr.bf16.mxu0 0
    %244 = vmatmul.mubr.bf16.gmra.mxu0 %v139
    %v245 = vpop.f32.mrf.mxu0
    %v246 = vadd.f32 %v161, %v245
    %v247 = vpop.f32.mrf.mxu0
    %v248 = vpop.f32.mrf.mxu0
    %v249 = vadd.f32 %v161, %v248
    %v250 = vpop.f32.mrf.mxu0
    %251 = vdwg.mxu0
    %v252 = vmax.f32 %v246, 0.0
    %v253 = vmax.f32 %v249, 0.0
    %v254 = vpack.c.bf16 %v253, %v252
    %v255 = vld [vmem:[#allocation5] sm:$0xf]
    %v256 = vld [vmem:[#allocation5 + $0x4] sm:$0xf]
    %v257 = vld [vmem:[#allocation5 + $0x8] sm:$0xf]
    %v258 = vld [vmem:[#allocation5 + $0xc] sm:$0xf]
    %v259 = vld [vmem:[#allocation5 + $0x10] sm:$0xf]
    %v260 = vld [vmem:[#allocation5 + $0x14] sm:$0xf]
    %v261 = vld [vmem:[#allocation5 + $0x18] sm:$0xf]
    %v262 = vld [vmem:[#allocation5 + $0x1c] sm:$0xf]
    %v263 = vld [vmem:[#allocation5 + $0x20] sm:$0xf]
    %v264 = vld [vmem:[#allocation5 + $0x24] sm:$0xf]
    %v265 = vld [vmem:[#allocation5 + $0x28] sm:$0xf]
    %v266 = vld [vmem:[#allocation5 + $0x2c] sm:$0xf]
    %v267 = vld [vmem:[#allocation5 + $0x30] sm:$0xf]
    %v268 = vld [vmem:[#allocation5 + $0x34] sm:$0xf]
    %v269 = vld [vmem:[#allocation5 + $0x38] sm:$0xf]
    %v270 = vld [vmem:[#allocation5 + $0x3c] sm:$0xf]
    %v271 = vld [vmem:[%s6] sm:$0x1]
    %v273 = vlaneseq
    %v274 = vshrl.u32 %v273, 7
    %v275 = vsub.s32 0, %v274
    %v276 = vrot.slane %v271, %v275
    %v294 = vunpack.c.l.b16 %v255
    %v295 = vunpack.c.l.b16 %v256
    %v296 = vunpack.c.l.b16 %v257
    %v297 = vunpack.c.l.b16 %v258
    %v298 = vunpack.c.l.b16 %v259
    %v299 = vunpack.c.l.b16 %v260
    %v300 = vunpack.c.l.b16 %v261
    %v301 = vunpack.c.l.b16 %v262
    %v302 = vunpack.c.l.b16 %v263
    %v303 = vunpack.c.l.b16 %v264
    %v304 = vunpack.c.l.b16 %v265
    %v305 = vunpack.c.l.b16 %v266
    %v306 = vunpack.c.l.b16 %v267
    %v307 = vunpack.c.l.b16 %v268
    %v308 = vunpack.c.l.b16 %v269
    %v309 = vunpack.c.l.b16 %v270
    %v310 = vpack.c.b16 %v295, %v294
    %v311 = vpack.c.b16 %v297, %v296
    %v312 = vpack.c.b16 %v299, %v298
    %v313 = vpack.c.b16 %v301, %v300
    %v314 = vpack.c.b16 %v303, %v302
    %v315 = vpack.c.b16 %v305, %v304
    %v316 = vpack.c.b16 %v307, %v306
    %v317 = vpack.c.b16 %v309, %v308
    %326 = vmatprep.subr.bf16.mxu0 0
    %327 = vmatpush1.bf16.msra.mxu0 %v317
    %328 = vmatprep.subr.bf16.mxu0 0
    %329 = vmatpush1.bf16.msra.mxu0 %v316
    %330 = vmatprep.subr.bf16.mxu0 0
    %331 = vmatpush1.bf16.msra.mxu0 %v315
    %332 = vmatprep.subr.bf16.mxu0 0
    %333 = vmatpush1.bf16.msra.mxu0 %v314
    %334 = vmatprep.subr.bf16.mxu0 0
    %335 = vmatpush1.bf16.msra.mxu0 %v313
    %336 = vmatprep.subr.bf16.mxu0 0
    %337 = vmatpush1.bf16.msra.mxu0 %v312
    %338 = vmatprep.subr.bf16.mxu0 0
    %339 = vmatpush1.bf16.msra.mxu0 %v311
    %340 = vmatprep.subr.bf16.mxu0 0
    %341 = vmatpush1.bf16.msra.mxu0 %v310
    %342 = vmatprep.subr.bf16.mxu0 0
    %343 = vmatpush2.bf16.msra.mxu0 0
    %344 = vmatprep.subr.bf16.mxu0 0
    %345 = vmatpush2.bf16.msra.mxu0 0
    %346 = vmatprep.subr.bf16.mxu0 0
    %347 = vmatpush2.bf16.msra.mxu0 0
    %348 = vmatprep.subr.bf16.mxu0 0
    %349 = vmatpush2.bf16.msra.mxu0 0
    %350 = vmatprep.subr.bf16.mxu0 0
    %351 = vmatpush2.bf16.msra.mxu0 0
    %352 = vmatprep.subr.bf16.mxu0 0
    %353 = vmatpush2.bf16.msra.mxu0 0
    %354 = vmatprep.subr.bf16.mxu0 0
    %355 = vmatpush2.bf16.msra.mxu0 0
    %356 = vmatprep.subr.bf16.mxu0 0
    %357 = vmatpush2.bf16.msra.mxu0 0
    %358 = vmatprep.mubr.bf16.mxu0 0
    %359 = vmatmul.mubr.bf16.gmra.mxu0 %v254
    %v360 = vpop.f32.mrf.mxu0
    %v361 = vadd.f32 %v276, %v360
    %v362 = vpop.f32.mrf.mxu0
    %v363 = vpop.f32.mrf.mxu0
    %v364 = vadd.f32 %v276, %v363
    %v365 = vpop.f32.mrf.mxu0
    %366 = vdwg.mxu0
    %v367 = vmax.f32 %v361, 0.0
    %v368 = vmax.f32 %v364, 0.0
    %v369 = vpack.c.bf16 %v368, %v367
    %v370 = vld [vmem:[%s7] sm:$0xf]
    %v371 = vld [vmem:[%s7 + $0x4] sm:$0xf]
    %v372 = vld [vmem:[%s7 + $0x8] sm:$0xf]
    %v373 = vld [vmem:[%s7 + $0xc] sm:$0xf]
    %v374 = vld [vmem:[%s7 + $0x10] sm:$0xf]
    %v375 = vld [vmem:[%s7 + $0x14] sm:$0xf]
    %v376 = vld [vmem:[%s7 + $0x18] sm:$0xf]
    %v377 = vld [vmem:[%s7 + $0x1c] sm:$0xf]
    %v378 = vld [vmem:[%s7 + $0x20] sm:$0xf]
    %v379 = vld [vmem:[%s7 + $0x24] sm:$0xf]
    %v380 = vld [vmem:[%s7 + $0x28] sm:$0xf]
    %v381 = vld [vmem:[%s7 + $0x2c] sm:$0xf]
    %v382 = vld [vmem:[%s7 + $0x30] sm:$0xf]
    %v383 = vld [vmem:[%s7 + $0x34] sm:$0xf]
    %v384 = vld [vmem:[%s7 + $0x38] sm:$0xf]
    %v385 = vld [vmem:[%s7 + $0x3c] sm:$0xf]
    %v386 = vld [vmem:[%s8] sm:$0x1]
    %v388 = vlaneseq
    %v389 = vshrl.u32 %v388, 7
    %v390 = vsub.s32 0, %v389
    %v391 = vrot.slane %v386, %v390
    %v409 = vunpack.c.l.b16 %v370
    %v410 = vunpack.c.l.b16 %v371
    %v411 = vunpack.c.l.b16 %v372
    %v412 = vunpack.c.l.b16 %v373
    %v413 = vunpack.c.l.b16 %v374
    %v414 = vunpack.c.l.b16 %v375
    %v415 = vunpack.c.l.b16 %v376
    %v416 = vunpack.c.l.b16 %v377
    %v417 = vunpack.c.l.b16 %v378
    %v418 = vunpack.c.l.b16 %v379
    %v419 = vunpack.c.l.b16 %v380
    %v420 = vunpack.c.l.b16 %v381
    %v421 = vunpack.c.l.b16 %v382
    %v422 = vunpack.c.l.b16 %v383
    %v423 = vunpack.c.l.b16 %v384
    %v424 = vunpack.c.l.b16 %v385
    %v425 = vpack.c.b16 %v410, %v409
    %v426 = vpack.c.b16 %v412, %v411
    %v427 = vpack.c.b16 %v414, %v413
    %v428 = vpack.c.b16 %v416, %v415
    %v429 = vpack.c.b16 %v418, %v417
    %v430 = vpack.c.b16 %v420, %v419
    %v431 = vpack.c.b16 %v422, %v421
    %v432 = vpack.c.b16 %v424, %v423
    %441 = vmatprep.subr.bf16.mxu0 0
    %442 = vmatpush1.bf16.msra.mxu0 %v432
    %443 = vmatprep.subr.bf16.mxu0 0
    %444 = vmatpush1.bf16.msra.mxu0 %v431
    %445 = vmatprep.subr.bf16.mxu0 0
    %446 = vmatpush1.bf16.msra.mxu0 %v430
    %447 = vmatprep.subr.bf16.mxu0 0
    %448 = vmatpush1.bf16.msra.mxu0 %v429
    %449 = vmatprep.subr.bf16.mxu0 0
    %450 = vmatpush1.bf16.msra.mxu0 %v428
    %451 = vmatprep.subr.bf16.mxu0 0
    %452 = vmatpush1.bf16.msra.mxu0 %v427
    %453 = vmatprep.subr.bf16.mxu0 0
    %454 = vmatpush1.bf16.msra.mxu0 %v426
    %455 = vmatprep.subr.bf16.mxu0 0
    %456 = vmatpush1.bf16.msra.mxu0 %v425
    %457 = vmatprep.subr.bf16.mxu0 0
    %458 = vmatpush2.bf16.msra.mxu0 0
    %459 = vmatprep.subr.bf16.mxu0 0
    %460 = vmatpush2.bf16.msra.mxu0 0
    %461 = vmatprep.subr.bf16.mxu0 0
    %462 = vmatpush2.bf16.msra.mxu0 0
    %463 = vmatprep.subr.bf16.mxu0 0
    %464 = vmatpush2.bf16.msra.mxu0 0
    %465 = vmatprep.subr.bf16.mxu0 0
    %466 = vmatpush2.bf16.msra.mxu0 0
    %467 = vmatprep.subr.bf16.mxu0 0
    %468 = vmatpush2.bf16.msra.mxu0 0
    %469 = vmatprep.subr.bf16.mxu0 0
    %470 = vmatpush2.bf16.msra.mxu0 0
    %471 = vmatprep.subr.bf16.mxu0 0
    %472 = vmatpush2.bf16.msra.mxu0 0
    %473 = vmatprep.mubr.bf16.mxu0 0
    %474 = vmatmul.mubr.bf16.gmra.mxu0 %v369
    %v475 = vpop.f32.mrf.mxu0
    %v476 = vadd.f32 %v391, %v475
    %v477 = vpop.f32.mrf.mxu0
    %v478 = vpop.f32.mrf.mxu0
    %v479 = vadd.f32 %v391, %v478
    %v480 = vpop.f32.mrf.mxu0
    %481 = vdwg.mxu0
    %v482 = vmax.f32 %v476, 0.0
    %v483 = vmax.f32 %v479, 0.0
    %vm484 = vcmask 130048
    %485 = vst.msk [vmem:[#allocation7] sm:$0xff] %vm484, %v482
    %486 = vst.msk [vmem:[#allocation7 + $0x8] sm:$0xff] %vm484, %v483
    // Predicated region
    $region46: #{tpu_custom_call.1} parent=1 // pred_check
      _
    $region47: #{tpu_custom_call.1} parent=1 // pred_check_branch
      %488 = sbr.rel (0) target = $region49
    $region48: #{tpu_custom_call.1} parent=1 // pred_region
      %s490 = ssub.s32 256, 256
      %491 = vsyncadd [#allocation4], %s490
      %s492 = sshll.u32 [#allocation7], 4
      %s493 = int_to_ptr.vmem [resolvable:$true] %s492
      %498 = dma.vmem_to_hbm [thread:$0]  %s493, 256, %s9, [#allocation4], 128, 128, 8
    $region49: #{tpu_custom_call.1} parent=1 // pred_fallthru
      _
    // Predicated region
    $region50: #{tpu_custom_call.1} parent=1 // pred_check
      _
    $region51: #{tpu_custom_call.1} parent=1 // pred_check_branch
      %500 = sbr.rel (0) target = $region53
    $region52: #{tpu_custom_call.1} parent=1 // pred_region
      %501 = dma.done [#allocation4], 256
    $region53: #{tpu_custom_call.1} parent=1 // pred_fallthru
      _
    %502 = vsyncpa [#allocation3], 1
    %503 = vsyncpa [#allocation6], 1
    %504 = vsyncpa [#allocation4], 1

</llo_original>
